<compile_context>
chip_gen: v7x
topology: tpu7x:2x2x1
jax: 0.10.0
libtpu: 0.0.40
codegen_flags: <defaults>
</compile_context>

<pallas_src>
import math

import jax
import jax.numpy as jnp
from jax import lax
from jax.experimental import pallas as pl
from jax.experimental.pallas import tpu as pltpu


_TARGET_BLOCK_BYTES = 4 * 1024 * 1024       # ~4 MiB tiles for the tiled kernels
_VMEM_LIMIT_TILED = 32 * 1024 * 1024        # scoped-vmem: safe on v5e/v6e/v7x
_MIN_FUSED_SLAB_BYTES = 4 * 1024 * 1024
_FUSED_HEADROOM_BYTES = 8 * 1024 * 1024
_FUSED_CHUNK_BYTES = 512 * 1024             # in-kernel row-chunk (bounded unroll)
_DEFAULT_VMEM_CAPACITY = 64 * 1024 * 1024   # v7x per-TC (smallest of the gens)


# --------------------------------------------------------------------------
# Hardware introspection (defensive: always falls back to safe defaults)
# --------------------------------------------------------------------------
def _tpu_vmem_capacity_bytes():
    try:
        cap = int(getattr(pltpu.get_tpu_info(), "vmem_capacity_bytes", 0))
        if cap > 0:
            return cap
    except Exception:
        pass
    return _DEFAULT_VMEM_CAPACITY


def _tpu_num_tensorcores():
    """Return 2 only when the runtime clearly reports a 2-TensorCore chip
    (v7x: <=64 MiB VMEM per TC); otherwise 1 (v5e/v6e or unknown)."""
    try:
        info = pltpu.get_tpu_info()
    except Exception:
        return 1
    try:
        cap = int(getattr(info, "vmem_capacity_bytes", 0))
    except Exception:
        cap = 0
    if cap <= 0 or cap > 96 * 1024 * 1024:
        return 1
    for name in ("num_cores", "core_count", "num_tensorcores",
                 "tensorcores_per_chip", "num_cores_per_chip"):
        try:
            if int(getattr(info, name)) == 2:
                return 2
        except Exception:
            continue
    return 1


# --------------------------------------------------------------------------
# Packing helpers
# --------------------------------------------------------------------------
def _sublanes(dtype):
    """Native sublane packing: 8 rows (4-byte), 16 (2-byte), 32 (1-byte)."""
    return max(8, 32 // jnp.dtype(dtype).itemsize)


def _pack_factor(c):
    """Rows folded into lanes so the packed last dim is a multiple of 128."""
    return 128 // math.gcd(c, 128)          # always a power of two


def _rows_per_block(n_rows, lanes, itemsize, sub, target_bytes):
    rows = max(sub, (target_bytes // max(lanes * itemsize, 1)) // sub * sub)
    return min(n_rows, rows)


# --------------------------------------------------------------------------
# Elementwise normalize: o = (x - mean) * inv_std       (tiled, ~4 MiB blocks)
# --------------------------------------------------------------------------
def _normalize_kernel(x_ref, mean_ref, istd_ref, o_ref):
    o_ref[...] = ((x_ref[...] - mean_ref[...]) * istd_ref[...]).astype(o_ref.dtype)


def _normalize(xp, mean_row, istd_row, tr, num_cores):
    n_rows, l = xp.shape
    num_blocks = pl.cdiv(n_rows, tr)
    cores = num_cores if (num_cores > 1 and num_blocks >= num_cores) else 1

    if cores == 1:
        return pl.pallas_call(
            _normalize_kernel,
            out_shape=jax.ShapeDtypeStruct((n_rows, l), xp.dtype),
            grid=(num_blocks,),
            in_specs=[pl.BlockSpec((tr, l), lambda i: (i, 0)),
                      pl.BlockSpec((1, l), lambda i: (0, 0)),
                      pl.BlockSpec((1, l), lambda i: (0, 0))],
            out_specs=pl.BlockSpec((tr, l), lambda i: (i, 0)),
            compiler_params=pltpu.CompilerParams(
                dimension_semantics=("parallel",),
                vmem_limit_bytes=_VMEM_LIMIT_TILED),
        )(xp, mean_row, istd_row)

    # v7x: split the row blocks across both TensorCores.
    bpc = pl.cdiv(num_blocks, cores)

    def xo_map(p, i):
        # Clamped duplicate blocks are always handled consecutively by the
        # same core and rewrite identical data -> benign.
        return (jnp.minimum(p * bpc + i, num_blocks - 1), 0)

    return pl.pallas_call(
        _normalize_kernel,
        out_shape=jax.ShapeDtypeStruct((n_rows, l), xp.dtype),
        grid=(cores, bpc),
        in_specs=[pl.BlockSpec((tr, l), xo_map),
                  pl.BlockSpec((1, l), lambda p, i: (0, 0)),
                  pl.BlockSpec((1, l), lambda p, i: (0, 0))],
        out_specs=pl.BlockSpec((tr, l), xo_map),
        compiler_params=pltpu.CompilerParams(
            dimension_semantics=(pltpu.CORE_PARALLEL, pltpu.ARBITRARY),
            vmem_limit_bytes=_VMEM_LIMIT_TILED),
    )(xp, mean_row, istd_row)


# --------------------------------------------------------------------------
# Tiled reduction: per-lane sum / sum-of-squares over all rows
# --------------------------------------------------------------------------
def _pooled_sums(xp, sub, tr, num_cores):
    """xp: (n_rows, l) with n_rows a multiple of `sub` (rows were padded).
    Accumulates into an (sub, l) VMEM scratch with pure VPU adds, one XLU
    cross-sublane reduce at the end.  Returns two (l,) f32 arrays."""
    n_rows, l = xp.shape
    g_rows = n_rows // sub
    x3 = xp.reshape(g_rows, sub, l)
    gpb = max(tr // sub, 1)
    num_blocks = pl.cdiv(g_rows, gpb)
    cores = num_cores if (num_cores > 1 and num_blocks > 1) else 1
    bpc = pl.cdiv(num_blocks, cores)
    needs_mask = (g_rows % gpb != 0) or (bpc * cores != num_blocks)

    def kernel(x_ref, sum_ref, sq_ref, acc_s, acc_q):
        p = pl.program_id(0)
        i = pl.program_id(1)

        @pl.when(i == 0)
        def _():
            acc_s[...] = jnp.zeros_like(acc_s)
            acc_q[...] = jnp.zeros_like(acc_q)

        x = x_ref[...].astype(jnp.float32)

        def accumulate(xv):
            acc_s[...] += jnp.sum(xv, axis=0)
            acc_q[...] += jnp.sum(xv * xv, axis=0)

        if needs_mask:
            # Mask only the (possibly partial / clamped-duplicate) final block
            # of each core; every other block takes the unmasked VPU path.
            @pl.when(i == bpc - 1)
            def _():
                g = p * bpc + i
                grp = jax.lax.broadcasted_iota(jnp.int32, x.shape, 0) + g * gpb
                accumulate(jnp.where(grp < g_rows, x, 0.0))

            @pl.when(i < bpc - 1)
            def _():
                accumulate(x)
        else:
            accumulate(x)

        @pl.when(i == bpc - 1)
        def _():
            sum_ref[...] = jnp.sum(acc_s[...], axis=0, keepdims=True)[None]
            sq_ref[...] = jnp.sum(acc_q[...], axis=0, keepdims=True)[None]

    def x_map(p, i):
        # Duplicate trailing blocks of the second core re-read the last valid
        # block and are fully masked inside the kernel.
        return (jnp.minimum(p * bpc + i, num_blocks - 1), 0, 0)

    if cores > 1:
        semantics = (pltpu.CORE_PARALLEL, pltpu.ARBITRARY)
    else:
        semantics = ("arbitrary", "arbitrary")

    ps, pq = pl.pallas_call(
        kernel,
        out_shape=(jax.ShapeDtypeStruct((cores, 1, l), jnp.float32),
                   jax.ShapeDtypeStruct((cores, 1, l), jnp.float32)),
        grid=(cores, bpc),
        in_specs=[pl.BlockSpec((gpb, sub, l), x_map)],
        out_specs=(pl.BlockSpec((1, 1, l), lambda p, i: (p, 0, 0)),
                   pl.BlockSpec((1, 1, l), lambda p, i: (p, 0, 0))),
        scratch_shapes=[pltpu.VMEM((sub, l), jnp.float32),
                        pltpu.VMEM((sub, l), jnp.float32)],
        compiler_params=pltpu.CompilerParams(
            dimension_semantics=semantics,
            vmem_limit_bytes=_VMEM_LIMIT_TILED),
    )(x3)
    return ps.sum(axis=(0, 1)), pq.sum(axis=(0, 1))


# --------------------------------------------------------------------------
# Fused path: one HBM read of x -> accumulated sums + normalized output
# --------------------------------------------------------------------------
def _make_fused_kernel(r, l, n_rows, chunk):
    shift0 = l // r                              # = C
    n_fold_steps = max(r.bit_length() - 1, 0)    # log2(R)
    n_full = n_rows // chunk
    tail = n_rows % chunk

    def kernel(scal_ref, x_ref, osum_ref, osq_ref, eps_ref,
               o_ref, xsum_ref, xsq_ref):
        # Phase 1: per-lane sums, walking the resident slab in row chunks
        # (sum and sum-of-squares from the same loaded chunk: single walk).
        def sum_body(j, carry):
            s, q = carry
            start = pl.multiple_of(j * chunk, chunk)
            xc = x_ref[pl.ds(start, chunk), :].astype(jnp.float32)
            return (s + jnp.sum(xc, axis=0, keepdims=True),
                    q + jnp.sum(xc * xc, axis=0, keepdims=True))

        zero_row = jnp.zeros((1, l), jnp.float32)
        s, q = lax.fori_loop(0, n_full, sum_body, (zero_row, zero_row))
        if tail:
            xt = x_ref[pl.ds(n_full * chunk, tail), :].astype(jnp.float32)
            s = s + jnp.sum(xt, axis=0, keepdims=True)
            q = q + jnp.sum(xt * xt, axis=0, keepdims=True)

        # Lane-fold by roll-doubling: after log2(R) steps every lane holds the
        # total of its channel class (lane % C), i.e. the per-channel sums
        # already tiled back into the packed layout.
        shift = shift0
        for _ in range(n_fold_steps):
            s = s + pltpu.roll(s, shift, 1)
            q = q + pltpu.roll(q, shift, 1)
            shift *= 2

        w = scal_ref[0]          # 1.0 if accumulating this step, else 0.0
        inv_cnt = scal_ref[1]    # 1 / max(updated count, 1)
        new_sum = osum_ref[...] + w * s
        new_sq = osq_ref[...] + w * q
        mean = new_sum * inv_cnt
        var = jnp.maximum(new_sq * inv_cnt - mean * mean, 0.0)
        std = jnp.maximum(jnp.sqrt(var), eps_ref[...])
        istd = 1.0 / std

        # Phase 2: normalized output from the same resident slab.
        def norm_body(j, carry):
            start = pl.multiple_of(j * chunk, chunk)
            xc = x_ref[pl.ds(start, chunk), :].astype(jnp.float32)
            o_ref[pl.ds(start, chunk), :] = ((xc - mean) * istd).astype(o_ref.dtype)
            return carry

        lax.fori_loop(0, n_full, norm_body, jnp.zeros((), jnp.int32))
        if tail:
            xt = x_ref[pl.ds(n_full * chunk, tail), :].astype(jnp.float32)
            o_ref[pl.ds(n_full * chunk, tail), :] = ((xt - mean) * istd).astype(o_ref.dtype)

        xsum_ref[...] = s
        xsq_ref[...] = q

    return kernel


def _fused_forward(scal, xp, old_sum_t, old_sq_t, eps_t, r, sub, vmem_limit):
    n_rows, l = xp.shape
    chunk = _rows_per_block(n_rows, l, 4, sub, _FUSED_CHUNK_BYTES)
    # TODO(synk): with pipeline_mode=pl.Buffered(1) on the x / o slabs
    # (grid=(1,) so multi-buffering buys nothing) the fused threshold could be
    # ~2x larger; kept on default buffering for compile safety and the
    # threshold sized conservatively for double-buffered slabs instead.
    return pl.pallas_call(
        _make_fused_kernel(r, l, n_rows, chunk),
        out_shape=(jax.ShapeDtypeStruct((n_rows, l), xp.dtype),
                   jax.ShapeDtypeStruct((1, l), jnp.float32),
                   jax.ShapeDtypeStruct((1, l), jnp.float32)),
        grid=(1,),
        in_specs=[pl.BlockSpec(memory_space=pltpu.MemorySpace.SMEM),
                  pl.BlockSpec((n_rows, l), lambda i: (0, 0)),
                  pl.BlockSpec((1, l), lambda i: (0, 0)),
                  pl.BlockSpec((1, l), lambda i: (0, 0)),
                  pl.BlockSpec((1, l), lambda i: (0, 0))],
        out_specs=(pl.BlockSpec((n_rows, l), lambda i: (0, 0)),
                   pl.BlockSpec((1, l), lambda i: (0, 0)),
                   pl.BlockSpec((1, l), lambda i: (0, 0))),
        compiler_params=pltpu.CompilerParams(
            dimension_semantics=("arbitrary",),
            vmem_limit_bytes=vmem_limit),
    )(scal, xp, old_sum_t, old_sq_t, eps_t)


# --------------------------------------------------------------------------
# Module wrapper
# --------------------------------------------------------------------------
class Normalizer:
    """JAX/Pallas port of the PyTorch Normalizer forward (training + eval)."""

    def __init__(self, size, max_accumulations=10 ** 6, std_epsilon=1e-8,
                 fused_slab_bytes=None, target_block_bytes=None):
        self.max_accumulations = jnp.asarray(float(max_accumulations), jnp.float32)
        self.count = jnp.asarray(0.0, jnp.float32)
        self.n_accumulations = jnp.asarray(0.0, jnp.float32)
        self.sum = jnp.zeros(size, jnp.float32)
        self.sum_squared = jnp.zeros(size, jnp.float32)
        self.one = jnp.asarray(1.0, jnp.float32)
        self.std_epsilon = jnp.full(size, std_epsilon, jnp.float32)
        self.dim_sizes = None

        # Per-generation sizing (derived from the chip's VMEM capacity).
        cap = _tpu_vmem_capacity_bytes()
        self._num_cores = _tpu_num_tensorcores()
        self._vmem_limit_fused = min((cap * 3) // 4, 100 * 1024 * 1024)
        auto_fused = max((self._vmem_limit_fused - _FUSED_HEADROOM_BYTES) // 4,
                         _MIN_FUSED_SLAB_BYTES)
        self._fused_slab_bytes = (auto_fused if fused_slab_bytes is None
                                  else fused_slab_bytes)
        self._target_block_bytes = (_TARGET_BLOCK_BYTES if target_block_bytes is None
                                    else target_block_bytes)

    # Statistics (match the PyTorch properties; variance clamped at 0).
    @property
    def mean(self):
        safe = jnp.maximum(self.count, self.one)
        return self.sum / safe

    @property
    def std(self):
        safe = jnp.maximum(self.count, self.one)
        m = self.sum / safe
        var = jnp.maximum(self.sum_squared / safe - m * m, 0.0)
        return jnp.maximum(jnp.sqrt(var), self.std_epsilon)

    def forward(self, x, training=True):
        orig_shape = x.shape
        b, *dim_sizes, c = x.shape
        self.dim_sizes = dim_sizes
        x2d = x.reshape(-1, c)                       # _pool_dims
        n = x2d.shape[0]

        # Lane-dense packing (+ zero-pad rows instead of an unpacked fallback).
        sub = _sublanes(x.dtype)
        r = _pack_factor(c)
        quantum = r * sub
        pad = (-n) % quantum
        if pad:
            x2d = jnp.pad(x2d, ((0, pad), (0, 0)))
        n_rows = (n + pad) // r
        l = r * c
        xp = x2d.reshape(n_rows, l)
        itemsize = jnp.dtype(x.dtype).itemsize
        tr = _rows_per_block(n_rows, l, itemsize, sub, self._target_block_bytes)
        slab_bytes = n_rows * l * itemsize

        if training:
            # Accumulation gate stays on-device (no host round-trip).
            gate = self.n_accumulations < self.max_accumulations
            w = gate.astype(jnp.float32)
            new_count = self.count + w * jnp.asarray(float(n), jnp.float32)
            inv_cnt = 1.0 / jnp.maximum(new_count, self.one)

            if slab_bytes <= self._fused_slab_bytes:
                old_sum_t = jnp.tile(self.sum, r).reshape(1, l)
                old_sq_t = jnp.tile(self.sum_squared, r).reshape(1, l)
                eps_t = jnp.tile(self.std_epsilon, r).reshape(1, l)
                scal = jnp.stack([w, inv_cnt]).astype(jnp.float32)
                out_p, xsum_t, xsq_t = _fused_forward(
                    scal, xp, old_sum_t, old_sq_t, eps_t, r, sub,
                    self._vmem_limit_fused)
                x_sum = xsum_t[0, :c]
                x_sq = xsq_t[0, :c]
            else:
                # Skip the whole reduction HBM pass once the cap is reached.
                zero = jnp.zeros((l,), jnp.float32)
                num_cores = self._num_cores
                s_l, q_l = lax.cond(
                    gate,
                    lambda v: _pooled_sums(v, sub, tr, num_cores),
                    lambda v: (zero, zero),
                    xp)
                x_sum = s_l.reshape(r, c).sum(axis=0) if r > 1 else s_l
                x_sq = q_l.reshape(r, c).sum(axis=0) if r > 1 else q_l
                out_p = None

            # _accumulate (weighted by the on-device gate)
            self.sum = self.sum + w * x_sum
            self.sum_squared = self.sum_squared + w * x_sq
            self.count = new_count
            self.n_accumulations = self.n_accumulations + w

            if out_p is None:
                mean = self.sum * inv_cnt
                var = jnp.maximum(self.sum_squared * inv_cnt - mean * mean, 0.0)
                std = jnp.maximum(jnp.sqrt(var), self.std_epsilon)
                istd = 1.0 / std
                out_p = _normalize(xp,
                                   jnp.tile(mean, r).reshape(1, l),
                                   jnp.tile(istd, r).reshape(1, l),
                                   tr, self._num_cores)
        else:
            mean = self.mean
            istd = 1.0 / self.std
            out_p = _normalize(xp,
                               jnp.tile(mean, r).reshape(1, l),
                               jnp.tile(istd, r).reshape(1, l),
                               tr, self._num_cores)

        out2d = out_p.reshape(-1, c)                 # un-pack lanes
        if pad:
            out2d = out2d[:n]
        return out2d.reshape(orig_shape)             # _unpool_dims

    # TODO(synk): inverse() (de-normalization) not required for the forward
    # pass; it would reuse the same tiled elementwise kernel with a fused
    # multiply-add (x * std + mean).


# --------------------------------------------------------------------------
# Pure-JAX references for testing
# --------------------------------------------------------------------------
def _reference_stats(x2d):
    xf = x2d.astype(jnp.float32)
    return jnp.sum(xf, axis=0), jnp.sum(xf * xf, axis=0)


def _reference_forward(x, std_epsilon=1e-8):
    """Training-mode forward starting from fresh buffers."""
    c = x.shape[-1]
    x2d = x.reshape(-1, c).astype(jnp.float32)
    n = x2d.shape[0]
    s, sq = _reference_stats(x2d)
    cnt = jnp.maximum(jnp.asarray(float(n), jnp.float32), 1.0)
    mean = s / cnt
    std = jnp.maximum(jnp.sqrt(jnp.maximum(sq / cnt - mean * mean, 0.0)),
                      jnp.full((c,), std_epsilon, jnp.float32))
    return ((x2d - mean) / std).astype(x.dtype).reshape(x.shape)


if __name__ == "__main__":
    key = jax.random.PRNGKey(0)
    k1, k2, k3, k4, k5 = jax.random.split(key, 5)

    # 1) Small slab -> fused single-read kernel (no padding, R=32).
    x1 = jax.random.normal(k1, (2, 16, 16, 4), jnp.float32) * 3.0 + 1.5
    norm1 = Normalizer(size=(4,))
    y1 = jax.block_until_ready(norm1.forward(x1, training=True))
    assert y1.shape == x1.shape and y1.dtype == x1.dtype
    assert jnp.allclose(y1, _reference_forward(x1), atol=1e-5, rtol=1e-5)

    # Eval path reuses the accumulated stats (standalone normalize kernel).
    y1e = jax.block_until_ready(norm1.forward(x1, training=False))
    assert jnp.allclose(y1e, y1, atol=1e-5, rtol=1e-5)

    # 2) Forced tiled path: two-pass reduce + normalize over multiple blocks.
    x2 = jax.random.normal(k2, (2, 128, 128, 4), jnp.float32) * 2.0 - 0.5
    norm2 = Normalizer(size=(4,), fused_slab_bytes=0,
                       target_block_bytes=256 * 1024)
    y2 = jax.block_until_ready(norm2.forward(x2, training=True))
    assert jnp.allclose(y2, _reference_forward(x2), atol=1e-4, rtol=1e-4)

    # 3) Accumulation cap: second call must not change the statistics
    #    (exercises the lax.cond skip of the reduction HBM pass).
    norm3 = Normalizer(size=(4,), max_accumulations=1, fused_slab_bytes=0,
                       target_block_bytes=256 * 1024)
    xa = jax.random.normal(k3, (2, 128, 128, 4), jnp.float32) + 2.0
    xb = jax.random.normal(k4, (2, 128, 128, 4), jnp.float32) - 1.0
    _ = jax.block_until_ready(norm3.forward(xa, training=True))
    count_after = float(norm3.count)
    yb = jax.block_until_ready(norm3.forward(xb, training=True))
    assert float(norm3.count) == count_after
    sa, qa = _reference_stats(xa.reshape(-1, 4))
    cnt_a = jnp.asarray(float(xa.reshape(-1, 4).shape[0]), jnp.float32)
    mean_a = sa / cnt_a
    std_a = jnp.maximum(jnp.sqrt(jnp.maximum(qa / cnt_a - mean_a * mean_a, 0.0)),
                        jnp.full((4,), 1e-8, jnp.float32))
    yb_ref = ((xb.reshape(-1, 4) - mean_a) / std_a).reshape(xb.shape)
    assert jnp.allclose(yb, yb_ref, atol=1e-4, rtol=1e-4)

    # 4) Row count not a multiple of the packing quantum -> padded fused path.
    x4 = jax.random.normal(k5, (2, 100, 4), jnp.float32) * 0.7 + 0.3
    norm4 = Normalizer(size=(4,))
    y4 = jax.block_until_ready(norm4.forward(x4, training=True))
    assert y4.shape == x4.shape
    assert jnp.allclose(y4, _reference_forward(x4), atol=1e-5, rtol=1e-5)

    # 5) Tail-masked tiled reduction (row blocks do not divide evenly).
    x5 = jax.random.normal(jax.random.PRNGKey(42), (2, 96, 4, 4), jnp.float32)
    norm5 = Normalizer(size=(4,), fused_slab_bytes=0, target_block_bytes=8192)
    y5 = jax.block_until_ready(norm5.forward(x5, training=True))
    assert jnp.allclose(y5, _reference_forward(x5), atol=1e-4, rtol=1e-4)

    print("KERNEL_OK")
</pallas_src>

<mosaic_0001>
module attributes {stable_mosaic.version = 11 : i64} {
  func.func @kernel(%arg0: i32, %arg1: memref<2xf32, #tpu.memory_space<smem>>, %arg2: memref<16x128xf32, #tpu.memory_space<vmem>>, %arg3: memref<1x128xf32, #tpu.memory_space<vmem>>, %arg4: memref<1x128xf32, #tpu.memory_space<vmem>>, %arg5: memref<1x128xf32, #tpu.memory_space<vmem>>, %arg6: memref<16x128xf32, #tpu.memory_space<vmem>>, %arg7: memref<1x128xf32, #tpu.memory_space<vmem>>, %arg8: memref<1x128xf32, #tpu.memory_space<vmem>>) attributes {dimension_semantics = [#tpu.dimension_semantics<arbitrary>], iteration_bounds = array<i64: 1>, scalar_prefetch = 0 : i64, scratch_operands = 0 : i64, tpu.core_type = #tpu.core_type<tc>, window_params = [{transform_indices = @transform_0, window_bounds = array<i64: 2>}, {pipeline_mode = #tpu.pipeline_mode<synchronous>, transform_indices = @transform_1, window_bounds = array<i64: 16, 128>}, {pipeline_mode = #tpu.pipeline_mode<synchronous>, transform_indices = @transform_2, window_bounds = array<i64: 1, 128>}, {pipeline_mode = #tpu.pipeline_mode<synchronous>, transform_indices = @transform_3, window_bounds = array<i64: 1, 128>}, {pipeline_mode = #tpu.pipeline_mode<synchronous>, transform_indices = @transform_4, window_bounds = array<i64: 1, 128>}, {pipeline_mode = #tpu.pipeline_mode<synchronous>, transform_indices = @transform_5, window_bounds = array<i64: 16, 128>}, {pipeline_mode = #tpu.pipeline_mode<synchronous>, transform_indices = @transform_6, window_bounds = array<i64: 1, 128>}, {pipeline_mode = #tpu.pipeline_mode<synchronous>, transform_indices = @transform_7, window_bounds = array<i64: 1, 128>}]} {
    %cst = arith.constant 0.000000e+00 : f32
    %0 = vector.broadcast %cst : f32 to vector<1x128xf32>
    %c0_i32 = arith.constant 0 : i32
    %c16_i32 = arith.constant 16 : i32
    %1 = arith.muli %c0_i32, %c16_i32 : i32
    %2 = tpu.assume_multiple %1, 16 : i32
    %3 = arith.index_cast %2 : i32 to index
    %c0 = arith.constant 0 : index
    %4 = vector.load %arg2[%3, %c0] : memref<16x128xf32, #tpu.memory_space<vmem>>, vector<16x128xf32>
    %cst_0 = arith.constant dense<0.000000e+00> : vector<128xf32>
    %5 = vector.multi_reduction <add>, %4, %cst_0 [0] : vector<16x128xf32> to vector<128xf32>
    %6 = vector.shape_cast %5 : vector<128xf32> to vector<1x128xf32>
    %7 = arith.addf %0, %6 : vector<1x128xf32>
    %8 = arith.mulf %4, %4 : vector<16x128xf32>
    %cst_1 = arith.constant dense<0.000000e+00> : vector<128xf32>
    %9 = vector.multi_reduction <add>, %8, %cst_1 [0] : vector<16x128xf32> to vector<128xf32>
    %10 = vector.shape_cast %9 : vector<128xf32> to vector<1x128xf32>
    %11 = arith.addf %0, %10 : vector<1x128xf32>
    %c1_i32 = arith.constant 1 : i32
    %c4_i32 = arith.constant 4 : i32
    %12 = tpu.dynamic_rotate %7 by %c4_i32 dim 1 : vector<1x128xf32>, i32 -> vector<1x128xf32>
    %13 = arith.addf %7, %12 : vector<1x128xf32>
    %c4_i32_2 = arith.constant 4 : i32
    %14 = tpu.dynamic_rotate %11 by %c4_i32_2 dim 1 : vector<1x128xf32>, i32 -> vector<1x128xf32>
    %15 = arith.addf %11, %14 : vector<1x128xf32>
    %c8_i32 = arith.constant 8 : i32
    %16 = tpu.dynamic_rotate %13 by %c8_i32 dim 1 : vector<1x128xf32>, i32 -> vector<1x128xf32>
    %17 = arith.addf %13, %16 : vector<1x128xf32>
    %c8_i32_3 = arith.constant 8 : i32
    %18 = tpu.dynamic_rotate %15 by %c8_i32_3 dim 1 : vector<1x128xf32>, i32 -> vector<1x128xf32>
    %19 = arith.addf %15, %18 : vector<1x128xf32>
    %c16_i32_4 = arith.constant 16 : i32
    %20 = tpu.dynamic_rotate %17 by %c16_i32_4 dim 1 : vector<1x128xf32>, i32 -> vector<1x128xf32>
    %21 = arith.addf %17, %20 : vector<1x128xf32>
    %c16_i32_5 = arith.constant 16 : i32
    %22 = tpu.dynamic_rotate %19 by %c16_i32_5 dim 1 : vector<1x128xf32>, i32 -> vector<1x128xf32>
    %23 = arith.addf %19, %22 : vector<1x128xf32>
    %c32_i32 = arith.constant 32 : i32
    %24 = tpu.dynamic_rotate %21 by %c32_i32 dim 1 : vector<1x128xf32>, i32 -> vector<1x128xf32>
    %25 = arith.addf %21, %24 : vector<1x128xf32>
    %c32_i32_6 = arith.constant 32 : i32
    %26 = tpu.dynamic_rotate %23 by %c32_i32_6 dim 1 : vector<1x128xf32>, i32 -> vector<1x128xf32>
    %27 = arith.addf %23, %26 : vector<1x128xf32>
    %c64_i32 = arith.constant 64 : i32
    %28 = tpu.dynamic_rotate %25 by %c64_i32 dim 1 : vector<1x128xf32>, i32 -> vector<1x128xf32>
    %29 = arith.addf %25, %28 : vector<1x128xf32>
    %c64_i32_7 = arith.constant 64 : i32
    %30 = tpu.dynamic_rotate %27 by %c64_i32_7 dim 1 : vector<1x128xf32>, i32 -> vector<1x128xf32>
    %31 = arith.addf %27, %30 : vector<1x128xf32>
    %c0_8 = arith.constant 0 : index
    %32 = memref.load %arg1[%c0_8] : memref<2xf32, #tpu.memory_space<smem>>
    %c1 = arith.constant 1 : index
    %33 = memref.load %arg1[%c1] : memref<2xf32, #tpu.memory_space<smem>>
    %c0_9 = arith.constant 0 : index
    %c0_10 = arith.constant 0 : index
    %34 = vector.load %arg3[%c0_9, %c0_10] : memref<1x128xf32, #tpu.memory_space<vmem>>, vector<1x128xf32>
    %35 = vector.broadcast %32 : f32 to vector<1x128xf32>
    %36 = arith.mulf %35, %29 : vector<1x128xf32>
    %37 = arith.addf %34, %36 : vector<1x128xf32>
    %c0_11 = arith.constant 0 : index
    %c0_12 = arith.constant 0 : index
    %38 = vector.load %arg4[%c0_11, %c0_12] : memref<1x128xf32, #tpu.memory_space<vmem>>, vector<1x128xf32>
    %39 = vector.broadcast %32 : f32 to vector<1x128xf32>
    %40 = arith.mulf %39, %31 : vector<1x128xf32>
    %41 = arith.addf %38, %40 : vector<1x128xf32>
    %42 = vector.broadcast %33 : f32 to vector<1x128xf32>
    %43 = arith.mulf %37, %42 : vector<1x128xf32>
    %44 = vector.broadcast %33 : f32 to vector<1x128xf32>
    %45 = arith.mulf %41, %44 : vector<1x128xf32>
    %46 = arith.mulf %43, %43 : vector<1x128xf32>
    %47 = arith.subf %45, %46 : vector<1x128xf32>
    %cst_13 = arith.constant 0.000000e+00 : f32
    %48 = vector.broadcast %cst_13 : f32 to vector<1x128xf32>
    %49 = arith.maximumf %47, %48 : vector<1x128xf32>
    %50 = math.sqrt %49 : vector<1x128xf32>
    %c0_14 = arith.constant 0 : index
    %c0_15 = arith.constant 0 : index
    %51 = vector.load %arg5[%c0_14, %c0_15] : memref<1x128xf32, #tpu.memory_space<vmem>>, vector<1x128xf32>
    %52 = arith.maximumf %50, %51 : vector<1x128xf32>
    %cst_16 = arith.constant 1.000000e+00 : f32
    %53 = vector.broadcast %cst_16 : f32 to vector<1x128xf32>
    %54 = arith.divf %53, %52 : vector<1x128xf32>
    %c0_i32_17 = arith.constant 0 : i32
    %c16_i32_18 = arith.constant 16 : i32
    %55 = arith.muli %c0_i32_17, %c16_i32_18 : i32
    %56 = tpu.assume_multiple %55, 16 : i32
    %57 = arith.index_cast %56 : i32 to index
    %c0_19 = arith.constant 0 : index
    %58 = vector.load %arg2[%57, %c0_19] : memref<16x128xf32, #tpu.memory_space<vmem>>, vector<16x128xf32>
    %59 = vector.broadcast %43 : vector<1x128xf32> to vector<16x128xf32>
    %60 = arith.subf %58, %59 : vector<16x128xf32>
    %61 = vector.broadcast %54 : vector<1x128xf32> to vector<16x128xf32>
    %62 = arith.mulf %60, %61 : vector<16x128xf32>
    %63 = arith.index_cast %56 : i32 to index
    %c0_20 = arith.constant 0 : index
    %64 = vector.load %arg6[%63, %c0_20] : memref<16x128xf32, #tpu.memory_space<vmem>>, vector<16x128xf32>
    tpu.vector_store %arg6[%63, %c0_20], %62 {strides = array<i32>} : memref<16x128xf32, #tpu.memory_space<vmem>>, vector<16x128xf32>,
    %c1_i32_21 = arith.constant 1 : i32
    %c0_22 = arith.constant 0 : index
    %c0_23 = arith.constant 0 : index
    %65 = vector.load %arg7[%c0_22, %c0_23] : memref<1x128xf32, #tpu.memory_space<vmem>>, vector<1x128xf32>
    tpu.vector_store %arg7[%c0_22, %c0_23], %29 {strides = array<i32>} : memref<1x128xf32, #tpu.memory_space<vmem>>, vector<1x128xf32>,
    %c0_24 = arith.constant 0 : index
    %c0_25 = arith.constant 0 : index
    %66 = vector.load %arg8[%c0_24, %c0_25] : memref<1x128xf32, #tpu.memory_space<vmem>>, vector<1x128xf32>
    tpu.vector_store %arg8[%c0_24, %c0_25], %31 {strides = array<i32>} : memref<1x128xf32, #tpu.memory_space<vmem>>, vector<1x128xf32>,
    return
  }
  func.func @transform_0(%arg0: i32) -> i32 {
    %c0_i32 = arith.constant 0 : i32
    %c0_i32_0 = arith.constant 0 : i32
    return %c0_i32 : i32
  }
  func.func @transform_1(%arg0: i32) -> (i32, i32) {
    %c0_i32 = arith.constant 0 : i32
    %c0_i32_0 = arith.constant 0 : i32
    %c0_i32_1 = arith.constant 0 : i32
    return %c0_i32, %c0_i32_0 : i32, i32
  }
  func.func @transform_2(%arg0: i32) -> (i32, i32) {
    %c0_i32 = arith.constant 0 : i32
    %c0_i32_0 = arith.constant 0 : i32
    %c0_i32_1 = arith.constant 0 : i32
    return %c0_i32, %c0_i32_0 : i32, i32
  }
  func.func @transform_3(%arg0: i32) -> (i32, i32) {
    %c0_i32 = arith.constant 0 : i32
    %c0_i32_0 = arith.constant 0 : i32
    %c0_i32_1 = arith.constant 0 : i32
    return %c0_i32, %c0_i32_0 : i32, i32
  }
  func.func @transform_4(%arg0: i32) -> (i32, i32) {
    %c0_i32 = arith.constant 0 : i32
    %c0_i32_0 = arith.constant 0 : i32
    %c0_i32_1 = arith.constant 0 : i32
    return %c0_i32, %c0_i32_0 : i32, i32
  }
  func.func @transform_5(%arg0: i32) -> (i32, i32) {
    %c0_i32 = arith.constant 0 : i32
    %c0_i32_0 = arith.constant 0 : i32
    %c0_i32_1 = arith.constant 0 : i32
    return %c0_i32, %c0_i32_0 : i32, i32
  }
  func.func @transform_6(%arg0: i32) -> (i32, i32) {
    %c0_i32 = arith.constant 0 : i32
    %c0_i32_0 = arith.constant 0 : i32
    %c0_i32_1 = arith.constant 0 : i32
    return %c0_i32, %c0_i32_0 : i32, i32
  }
  func.func @transform_7(%arg0: i32) -> (i32, i32) {
    %c0_i32 = arith.constant 0 : i32
    %c0_i32_0 = arith.constant 0 : i32
    %c0_i32_1 = arith.constant 0 : i32
    return %c0_i32, %c0_i32_0 : i32, i32
  }
}

</mosaic_0001>

<llo_original>
// kernel: tpu_custom_call.1
$region0: #{tpu_custom_call.1}
  #allocation0 [shape = 'u32[]', space=smem, size = 0x4, offset = 0x4, fixed_abs, tag = 'smem constant byte address 0x4 - core index']
  #allocation1 [shape = 'u32[144,128]{1,0:T(1,128)}', space=vmem, size = 0x12000, scoped, tag = 'internal scratch']
  %s0 = inlined_call_operand.hbm [shape: f32[2], index: 0, kind: input, shape index: {}]
  %s1 = inlined_call_operand.hbm [shape: f32[16,128], index: 1, kind: input, shape index: {}]
  %s2 = inlined_call_operand.vmem [shape: f32[1,128], index: 2, kind: input, shape index: {}]
  %s3 = inlined_call_operand.vmem [shape: f32[1,128], index: 3, kind: input, shape index: {}]
  %s4 = inlined_call_operand.vmem [shape: f32[1,128], index: 4, kind: input, shape index: {}]
  %s5 = inlined_call_operand.hbm [shape: f32[16,128], index: 5, kind: output, shape index: {0}]
  %s6 = inlined_call_operand.hbm [shape: f32[1,128], index: 6, kind: output, shape index: {1}]
  %s7 = inlined_call_operand.hbm [shape: f32[1,128], index: 7, kind: output, shape index: {2}]
  %8 = xla_tuple %s5, %s6, %s7
  %s9 = sld [smem:[#allocation0]]
  $region54: #{tpu_custom_call.1} parent=0
    _
  %s11 = ssub.s32 1, %s9
  %s12 = scalar_select 0, %s11, %s9
  $region1: #{tpu_custom_call.1} parent=0
    #allocation2 [shape = 'u8[512]{0}', space=smem, size = 0x200, scoped, tag = 'input window, operand 0, single buffered']
    #allocation3 [shape = 's32[1]{0}', space=sflag, size = 0x4, scoped, tag = 'scoped memory for tpu_custom_call.1']
    #allocation4 [shape = 's32[1]{0}', space=sflag, size = 0x4, scoped, tag = 'scoped memory for tpu_custom_call.1']
    #allocation5 [shape = 's32[1]{0}', space=sflag, size = 0x4, scoped, tag = 'scoped memory for tpu_custom_call.1']
    #allocation6 [shape = 'u8[8192]{0}', space=vmem, size = 0x2000, scoped, tag = 'input window, operand 1, single buffered']
    #allocation7 [shape = 'u8[8192]{0}', space=vmem, size = 0x2000, scoped, tag = 'output window, operand 0, single buffered']
    #allocation8 [shape = 'u8[512]{0}', space=vmem, size = 0x400, scoped, tag = 'output window, operand 1, single buffered']
    #allocation9 [shape = 's32[1]{0}', space=sflag, size = 0x4, scoped, tag = 'scoped memory for tpu_custom_call.1']
    #allocation10 [shape = 'u8[512]{0}', space=vmem, size = 0x400, scoped, tag = 'output window, operand 2, single buffered']
    %13 = vsyncpa [#allocation5], 0
    %14 = vsyncpa [#allocation3], 0
    %15 = vsyncpa [#allocation4], 0
    %16 = vsyncpa [#allocation9], 0
    // Predicated region
    $region2: #{tpu_custom_call.1} parent=1 // pred_check
      _
    $region3: #{tpu_custom_call.1} parent=1 // pred_check_branch
      %18 = sbr.rel (0) target = $region5
    $region4: #{tpu_custom_call.1} parent=1 // pred_region
      %s20 = ssub.s32 16, 16
      %21 = vsyncadd [#allocation5], %s20
      %24 = dma.hbm_to_smem %s0, 16, [#allocation2], [#allocation5]
    $region5: #{tpu_custom_call.1} parent=1 // pred_fallthru
      _
    // Predicated region
    $region6: #{tpu_custom_call.1} parent=1 // pred_check
      _
    $region7: #{tpu_custom_call.1} parent=1 // pred_check_branch
      %26 = sbr.rel (0) target = $region9
    $region8: #{tpu_custom_call.1} parent=1 // pred_region
      %s28 = ssub.s32 256, 256
      %29 = vsyncadd [#allocation3], %s28
      %s30 = sshll.u32 [#allocation6], 4
      %s31 = int_to_ptr.vmem [resolvable:$true] %s30
      %36 = dma.hbm_to_vmem [thread:$0]  %s1, 256, %s31, [#allocation3], 128, 128, 8
    $region9: #{tpu_custom_call.1} parent=1 // pred_fallthru
      _
    // Predicated region
    $region10: #{tpu_custom_call.1} parent=1 // pred_check
      _
    $region11: #{tpu_custom_call.1} parent=1 // pred_check_branch
      %38 = sbr.rel (0) target = $region13
    $region12: #{tpu_custom_call.1} parent=1 // pred_region
      _
    $region13: #{tpu_custom_call.1} parent=1 // pred_fallthru
      _
    // Predicated region
    $region14: #{tpu_custom_call.1} parent=1 // pred_check
      _
    $region15: #{tpu_custom_call.1} parent=1 // pred_check_branch
      %40 = sbr.rel (0) target = $region17
    $region16: #{tpu_custom_call.1} parent=1 // pred_region
      _
    $region17: #{tpu_custom_call.1} parent=1 // pred_fallthru
      _
    // Predicated region
    $region18: #{tpu_custom_call.1} parent=1 // pred_check
      _
    $region19: #{tpu_custom_call.1} parent=1 // pred_check_branch
      %42 = sbr.rel (0) target = $region21
    $region20: #{tpu_custom_call.1} parent=1 // pred_region
      _
    $region21: #{tpu_custom_call.1} parent=1 // pred_fallthru
      _
    // Predicated region
    $region22: #{tpu_custom_call.1} parent=1 // pred_check
      _
    $region23: #{tpu_custom_call.1} parent=1 // pred_check_branch
      %44 = sbr.rel (0) target = $region25
    $region24: #{tpu_custom_call.1} parent=1 // pred_region
      %45 = dma.done [#allocation5], 16
    $region25: #{tpu_custom_call.1} parent=1 // pred_fallthru
      _
    // Predicated region
    $region26: #{tpu_custom_call.1} parent=1 // pred_check
      _
    $region27: #{tpu_custom_call.1} parent=1 // pred_check_branch
      %47 = sbr.rel (0) target = $region29
    $region28: #{tpu_custom_call.1} parent=1 // pred_region
      %48 = dma.done [#allocation3], 256
    $region29: #{tpu_custom_call.1} parent=1 // pred_fallthru
      _
    %49 = sfence
    %v50 = vld [vmem:[#allocation6] sm:$0xff]
    %v51 = vld [vmem:[#allocation6 + $0x8] sm:$0xff]
    %v52 = vadd.f32 %v50, %v51
    %v53 = vrot.slane %v52, 4
    %v54 = vadd.f32 %v52, %v53
    %v55 = vrot.slane %v54, 2
    %v56 = vadd.f32 %v54, %v55
    %v57 = vrot.slane %v56, 1
    %v58 = vadd.f32 %v56, %v57
    %v59 = vadd.f32 %v58, 0.0
    %v60 = vmul.f32 %v50, %v50
    %v61 = vmul.f32 %v51, %v51
    %v62 = vadd.f32 %v60, %v61
    %v63 = vrot.slane %v62, 4
    %v64 = vadd.f32 %v62, %v63
    %v65 = vrot.slane %v64, 2
    %v66 = vadd.f32 %v64, %v65
    %v67 = vrot.slane %v66, 1
    %v68 = vadd.f32 %v66, %v67
    %v69 = vadd.f32 %v68, 0.0
    %70 = vrot.lane.b32.xlu0 %v59, 4
    %v71 = vpop.permute.xlu0 %70
    %v72 = vadd.f32 %v59, %v71
    %73 = vrot.lane.b32.xlu0 %v69, 4
    %v74 = vpop.permute.xlu0 %73
    %v75 = vadd.f32 %v69, %v74
    %76 = vrot.lane.b32.xlu0 %v72, 8
    %v77 = vpop.permute.xlu0 %76
    %v78 = vadd.f32 %v72, %v77
    %79 = vrot.lane.b32.xlu0 %v75, 8
    %v80 = vpop.permute.xlu0 %79
    %v81 = vadd.f32 %v75, %v80
    %82 = vrot.lane.b32.xlu0 %v78, 16
    %v83 = vpop.permute.xlu0 %82
    %v84 = vadd.f32 %v78, %v83
    %85 = vrot.lane.b32.xlu0 %v81, 16
    %v86 = vpop.permute.xlu0 %85
    %v87 = vadd.f32 %v81, %v86
    %88 = vrot.lane.b32.xlu0 %v84, 32
    %v89 = vpop.permute.xlu0 %88
    %v90 = vadd.f32 %v84, %v89
    %91 = vrot.lane.b32.xlu0 %v87, 32
    %v92 = vpop.permute.xlu0 %91
    %v93 = vadd.f32 %v87, %v92
    %94 = vrot.lane.b32.xlu0 %v90, 64
    %v95 = vpop.permute.xlu0 %94
    %v96 = vadd.f32 %v90, %v95
    %97 = vrot.lane.b32.xlu0 %v93, 64
    %v98 = vpop.permute.xlu0 %97
    %v99 = vadd.f32 %v93, %v98
    %s100 = sld [smem:[#allocation2]]
    %s101 = sld [smem:[#allocation2 + $0x1]]
    %v102 = vld [vmem:[%s2] sm:$0x1]
    %v103 = vstv %s100
    %v104 = vmul.f32 %v103, %v96
    %v105 = vadd.f32 %v102, %v104
    %v106 = vld [vmem:[%s3] sm:$0x1]
    %v107 = vmul.f32 %v103, %v99
    %v108 = vadd.f32 %v106, %v107
    %v109 = vstv %s101
    %v110 = vmul.f32 %v105, %v109
    %v111 = vmul.f32 %v108, %v109
    %v112 = vmul.f32 %v110, %v110
    %v113 = vsub.f32 %v111, %v112
    %v114 = vmax.f32 %v113, 0.0
    %v115 = vrsqrt.pop %v114
    %v116 = vmul.f32 %v114, %v115
    %vm117 = vcmp.eq.f32.partialorder %v114, inf
    %v118 = vsel %vm117, %v114, %v116
    %vm119 = vcmp.eq.f32.partialorder %v114, 0.0
    %v120 = vand.u32 %v114, 2147483648
    %v121 = vsel %vm119, %v120, %v118
    %v122 = vld [vmem:[%s4] sm:$0x1]
    %v123 = vmax.f32 %v121, %v122
    %v124 = vrcp.pop %v123
    %v125 = vmul.f32 1.0, %v124
    %v127 = vlaneseq
    %v128 = vshrl.u32 %v127, 7
    %v129 = vsub.s32 0, %v128
    %v130 = vrot.slane %v110, %v129
    %v132 = vsub.f32 %v50, %v130
    %v133 = vsub.f32 %v51, %v130
    %v135 = vlaneseq
    %v136 = vshrl.u32 %v135, 7
    %v137 = vsub.s32 0, %v136
    %v138 = vrot.slane %v125, %v137
    %v140 = vmul.f32 %v132, %v138
    %v141 = vmul.f32 %v133, %v138
    %142 = vst [vmem:[#allocation7] sm:$0xff] %v140
    %143 = vst [vmem:[#allocation7 + $0x8] sm:$0xff] %v141
    %144 = vst [vmem:[#allocation8] sm:$0x1] %v96
    %145 = vst [vmem:[#allocation10] sm:$0x1] %v99
    // Predicated region
    $region30: #{tpu_custom_call.1} parent=1 // pred_check
      _
    $region31: #{tpu_custom_call.1} parent=1 // pred_check_branch
      %147 = sbr.rel (0) target = $region33
    $region32: #{tpu_custom_call.1} parent=1 // pred_region
      %s149 = ssub.s32 256, 256
      %150 = vsyncadd [#allocation4], %s149
      %s151 = sshll.u32 [#allocation7], 4
      %s152 = int_to_ptr.vmem [resolvable:$true] %s151
      %157 = dma.vmem_to_hbm [thread:$0]  %s152, 256, %s5, [#allocation4], 128, 128, 8
    $region33: #{tpu_custom_call.1} parent=1 // pred_fallthru
      _
    // Predicated region
    $region34: #{tpu_custom_call.1} parent=1 // pred_check
      _
    $region35: #{tpu_custom_call.1} parent=1 // pred_check_branch
      %159 = sbr.rel (0) target = $region37
    $region36: #{tpu_custom_call.1} parent=1 // pred_region
      %s161 = ssub.s32 16, 16
      %162 = vsyncadd [#allocation9], %s161
      %s164 = sshll.u32 [#allocation8], 4
      %s165 = int_to_ptr.vmem [resolvable:$true] %s164
      %167 = dma.vmem_to_hbm [thread:$0]  %s165, 16, %s6, [#allocation9]
    $region37: #{tpu_custom_call.1} parent=1 // pred_fallthru
      _
    // Predicated region
    $region38: #{tpu_custom_call.1} parent=1 // pred_check
      _
    $region39: #{tpu_custom_call.1} parent=1 // pred_check_branch
      %169 = sbr.rel (0) target = $region41
    $region40: #{tpu_custom_call.1} parent=1 // pred_region
      %s171 = ssub.s32 16, 16
      %172 = vsyncadd [#allocation9], %s171
      %s174 = sshll.u32 [#allocation10], 4
      %s175 = int_to_ptr.vmem [resolvable:$true] %s174
      %177 = dma.vmem_to_hbm [thread:$0]  %s175, 16, %s7, [#allocation9]
    $region41: #{tpu_custom_call.1} parent=1 // pred_fallthru
      _
    // Predicated region
    $region42: #{tpu_custom_call.1} parent=1 // pred_check
      _
    $region43: #{tpu_custom_call.1} parent=1 // pred_check_branch
      %179 = sbr.rel (0) target = $region45
    $region44: #{tpu_custom_call.1} parent=1 // pred_region
      %180 = dma.done [#allocation4], 256
    $region45: #{tpu_custom_call.1} parent=1 // pred_fallthru
      _
    // Predicated region
    $region46: #{tpu_custom_call.1} parent=1 // pred_check
      _
    $region47: #{tpu_custom_call.1} parent=1 // pred_check_branch
      %182 = sbr.rel (0) target = $region49
    $region48: #{tpu_custom_call.1} parent=1 // pred_region
      %183 = dma.done [#allocation9], 16
    $region49: #{tpu_custom_call.1} parent=1 // pred_fallthru
      _
    // Predicated region
    $region50: #{tpu_custom_call.1} parent=1 // pred_check
      _
    $region51: #{tpu_custom_call.1} parent=1 // pred_check_branch
      %185 = sbr.rel (0) target = $region53
    $region52: #{tpu_custom_call.1} parent=1 // pred_region
      %186 = dma.done [#allocation9], 16
    $region53: #{tpu_custom_call.1} parent=1 // pred_fallthru
      _
    %187 = vsyncpa [#allocation3], 1
    %188 = vsyncpa [#allocation4], 1
    %189 = vsyncpa [#allocation9], 1
    %190 = vsyncpa [#allocation5], 1

</llo_original>
